<compile_context>
chip_gen: v7x
topology: tpu7x:2x2x1
jax: 0.10.0
libtpu: 0.0.40
codegen_flags: <defaults>
</compile_context>

<pallas_src>
import math

import jax
import jax.numpy as jnp
from jax.experimental import pallas as pl
from jax.experimental.pallas import tpu as pltpu

_SQRT_2_OVER_PI = math.sqrt(2.0 / math.pi)


def _gelu_new(x):
    # HF "gelu_new" / tanh approximation used by T5's gated act (EUP tanh).
    return 0.5 * x * (1.0 + jnp.tanh(_SQRT_2_OVER_PI * (x + 0.044715 * x * x * x)))


def _round_up(x, m):
    return ((x + m - 1) // m) * m


def _sublane_multiple(dtype):
    # Rows per packed vreg sublane group: f32 -> 8, bf16/f16 -> 16, int8/fp8 -> 32.
    return {4: 8, 2: 16, 1: 32}.get(jnp.dtype(dtype).itemsize, 8)


def _vmem_capacity_bytes():
    try:
        return int(pltpu.get_tpu_info().vmem_capacity_bytes)
    except Exception:
        # Conservative fallback: true on v7x, a safe lower bound elsewhere.
        return 64 * 1024 * 1024


def _pick_tff(d_ff, target):
    """Largest divisor of d_ff that is a multiple of 256 (or 128) and <= target."""
    target = min(target, d_ff)
    for align in (256, 128):
        t = (target // align) * align
        while t >= align:
            if d_ff % t == 0:
                return t
            t -= align
    return d_ff  # tiny / oddly-sized d_ff: single full-width reduction step


def _vmem_bytes(tm, tff, d_model, xb, wb, ob):
    return (2 * tm * d_model * xb            # x tile (double-buffered)
            + 2 * d_model * (2 * tff) * wb   # fused wi_0|wi_1 slab
            + 2 * tff * d_model * wb         # wo slab
            + 2 * tff * 4 + 2 * d_model * 4  # mask tiles (f32)
            + tm * d_model * 4               # f32 accumulator scratch
            + 2 * tm * d_model * ob)         # output tile


def _choose_tiles(M_r, d_model, d_ff, xb, wb, ob, budget, sub, tm_req, tff_req):
    if tff_req is not None and d_ff % tff_req == 0:
        tff = tff_req
    else:
        tff = _pick_tff(d_ff, 2048)

    if tm_req is not None:
        tm = max(sub, min(_round_up(tm_req, sub), M_r))
    elif M_r <= 1024:
        tm = M_r
    else:
        tm = 512
        if _vmem_bytes(1024, tff, d_model, xb, wb, ob) <= budget:
            tm = 1024  # v5e/v6e have VMEM to spare -> push toward MXU-bound

    # Shrink to fit the VMEM budget (keeps the pipeline double-buffered).
    while _vmem_bytes(tm, tff, d_model, xb, wb, ob) > budget:
        if tff > 128:
            new_tff = _pick_tff(d_ff, max(tff // 2, 128))
            if new_tff < tff:
                tff = new_tff
                continue
        if tm > sub:
            tm = max(sub, (tm // 2 // sub) * sub)
            continue
        break
    return tm, tff


def _ffn_kernel(x_ref, w01_ref, wo_ref, im_ref, om_ref, o_ref, acc_ref):
    """One (tm, d_model) row tile x one (tff) slice of the FFN width."""
    k = pl.program_id(1)
    tff = wo_ref.shape[0]  # static block shape

    @pl.when(k == 0)
    def _init():
        acc_ref[...] = jnp.zeros_like(acc_ref)

    x = x_ref[...]  # native dtype -> MXU
    # Single wide matmul against the fused [gate | up] weight slab.
    gl = jnp.dot(x, w01_ref[...], preferred_element_type=jnp.float32)
    gate = _gelu_new(gl[:, :tff])
    lin = gl[:, tff:]
    # Intermediate mask applied in-kernel (VPU mul, hidden under the MXU);
    # cast mirrors the module's cast of hidden_states to wo.weight.dtype.
    h = (gate * lin * im_ref[...]).astype(wo_ref.dtype)
    acc_ref[...] += jnp.dot(h, wo_ref[...], preferred_element_type=jnp.float32)

    @pl.when(k == pl.num_programs(1) - 1)
    def _finalize():
        o_ref[...] = (acc_ref[...] * om_ref[...]).astype(o_ref.dtype)


def t5_gated_ffn(hidden_states, w0, w1, wo, intermediate_mask=None,
                 output_mask=None, *, tm=None, tff=None, cast_to_bf16=False):
    """hidden_states: [..., d_model]; w0/w1: [d_model, d_ff] (pre-transposed);
    wo: [d_ff, d_model] (pre-transposed); masks broadcastable to [d_ff] / [d_model].

    Note: f32 matmul operands take multiple MXU passes on v5e/v6e/v7x; pass
    cast_to_bf16=True (or bf16 inputs) for full MXU throughput.
    """
    orig_shape = hidden_states.shape
    d_model = orig_shape[-1]
    d_ff = w0.shape[1]
    assert w0.shape == (d_model, d_ff) and w1.shape == (d_model, d_ff)
    assert wo.shape == (d_ff, d_model)

    # TODO(synk): nn.Dropout is identity in eval mode; training-mode dropout
    # is not implemented.

    if cast_to_bf16:
        hidden_states = hidden_states.astype(jnp.bfloat16)
        w0 = w0.astype(jnp.bfloat16)
        w1 = w1.astype(jnp.bfloat16)
        wo = wo.astype(jnp.bfloat16)
    out_dtype = hidden_states.dtype

    im2d = (jnp.ones((1, d_ff), jnp.float32) if intermediate_mask is None
            else jnp.reshape(intermediate_mask, (1, d_ff)).astype(jnp.float32))
    om2d = (jnp.ones((1, d_model), jnp.float32) if output_mask is None
            else jnp.reshape(output_mask, (1, d_model)).astype(jnp.float32))

    x2d = hidden_states.reshape(-1, d_model)
    M = x2d.shape[0]

    xb = jnp.dtype(x2d.dtype).itemsize
    wb = jnp.dtype(w0.dtype).itemsize
    ob = jnp.dtype(out_dtype).itemsize
    sub = _sublane_multiple(x2d.dtype)
    M_r = _round_up(M, sub)

    vmem_cap = _vmem_capacity_bytes()
    budget = int(vmem_cap * 0.75)  # ~96 MiB on v5e/v6e, ~48 MiB on v7x
    tm_sel, tff_sel = _choose_tiles(M_r, d_model, d_ff, xb, wb, ob,
                                    budget, sub, tm, tff)

    M_pad = _round_up(M, tm_sel)
    if M_pad != M:
        x2d = jnp.pad(x2d, ((0, M_pad - M), (0, 0)))

    grid_k = d_ff // tff_sel
    grid = (M_pad // tm_sel, grid_k)

    # Fuse wi_0 / wi_1 into one [d_model, 2*d_ff] slab, interleaved per tff
    # block, so each grid step issues a single wider MXU matmul.
    # TODO(synk): for serving, pre-fuse once per weight set (layout depends on
    # tff) instead of paying this weight-prep pass on every call.
    w01 = jnp.concatenate(
        [w0.reshape(d_model, grid_k, tff_sel),
         w1.reshape(d_model, grid_k, tff_sel)],
        axis=2).reshape(d_model, 2 * d_ff)

    vmem_est = _vmem_bytes(tm_sel, tff_sel, d_model, xb, wb, ob)
    vmem_limit = max(32 * 1024 * 1024, int(vmem_est * 1.3))
    vmem_limit = min(vmem_limit, int(vmem_cap * 0.9))

    cost = pl.CostEstimate(
        flops=6 * M_pad * d_model * d_ff,             # gate+up+down matmuls
        transcendentals=M_pad * d_ff,                 # tanh in gelu_new
        bytes_accessed=(M_pad * d_model * (xb + ob)
                        + grid[0] * 3 * d_model * d_ff * wb),
    )

    out2d = pl.pallas_call(
        _ffn_kernel,
        out_shape=jax.ShapeDtypeStruct((M_pad, d_model), out_dtype),
        grid_spec=pltpu.PrefetchScalarGridSpec(
            num_scalar_prefetch=0,
            grid=grid,
            in_specs=[
                pl.BlockSpec((tm_sel, d_model), lambda i, k: (i, 0)),       # x rows
                pl.BlockSpec((d_model, 2 * tff_sel), lambda i, k: (0, k)),  # fused wi
                pl.BlockSpec((tff_sel, d_model), lambda i, k: (k, 0)),      # wo rows
                pl.BlockSpec((1, tff_sel), lambda i, k: (0, k)),            # intermediate mask
                pl.BlockSpec((1, d_model), lambda i, k: (0, 0)),            # output mask
            ],
            out_specs=pl.BlockSpec((tm_sel, d_model), lambda i, k: (i, 0)),
            scratch_shapes=[pltpu.VMEM((tm_sel, d_model), jnp.float32)],
        ),
        compiler_params=pltpu.CompilerParams(
            dimension_semantics=("parallel", "arbitrary"),
            vmem_limit_bytes=vmem_limit),
        cost_estimate=cost,
    )(x2d, w01, wo, im2d, om2d)

    # TODO(synk): for decode-sized M on v7x, a second parallel grid axis over
    # d_model output columns could occupy the second TensorCore (not done here;
    # it duplicates gate/up weight streaming for BW-bound shapes).
    return out2d[:M].reshape(orig_shape)


if __name__ == "__main__":
    # Small config consistent with the module's shapes.
    B, S, d_model, d_ff = 2, 8, 32, 64

    key = jax.random.PRNGKey(0)
    k_x, k_w0, k_w1, k_wo, k_im, k_om = jax.random.split(key, 6)

    hidden_states = jax.random.normal(k_x, (B, S, d_model), dtype=jnp.float32)
    # Deterministic "Linear" weights; stored pre-transposed as [in, out].
    w0 = jax.random.normal(k_w0, (d_model, d_ff), dtype=jnp.float32) * 0.05
    w1 = jax.random.normal(k_w1, (d_model, d_ff), dtype=jnp.float32) * 0.05
    wo = jax.random.normal(k_wo, (d_ff, d_model), dtype=jnp.float32) * 0.05
    # Binary-ish masks as in structured-pruning usage.
    intermediate_mask = (jax.random.uniform(k_im, (d_ff,)) > 0.3).astype(jnp.float32)
    output_mask = (jax.random.uniform(k_om, (d_model,)) > 0.3).astype(jnp.float32)

    out = t5_gated_ffn(hidden_states, w0, w1, wo,
                       intermediate_mask, output_mask)
    out = jax.block_until_ready(out)

    # Pure-JAX reference (same ordering as the PyTorch module).
    g = _gelu_new(hidden_states @ w0)
    l = hidden_states @ w1
    ref = ((g * l * intermediate_mask) @ wo) * output_mask
    assert out.shape == ref.shape
    assert jnp.allclose(out, ref, atol=1e-4, rtol=1e-4), "mismatch vs reference"

    print("KERNEL_OK")
</pallas_src>

<mosaic_0001>
module attributes {stable_mosaic.version = 11 : i64} {
  func.func @_ffn_kernel(%arg0: i32, %arg1: i32, %arg2: memref<16x32xf32, #tpu.memory_space<vmem>>, %arg3: memref<32x128xf32, #tpu.memory_space<vmem>>, %arg4: memref<64x32xf32, #tpu.memory_space<vmem>>, %arg5: memref<1x64xf32, #tpu.memory_space<vmem>>, %arg6: memref<1x32xf32, #tpu.memory_space<vmem>>, %arg7: memref<16x32xf32, #tpu.memory_space<vmem>>, %arg8: memref<16x32xf32, #tpu.memory_space<vmem>>) attributes {dimension_semantics = [#tpu.dimension_semantics<parallel>, #tpu.dimension_semantics<arbitrary>], iteration_bounds = array<i64: 1, 1>, scalar_prefetch = 0 : i64, scratch_operands = 1 : i64, tpu.core_type = #tpu.core_type<tc>, window_params = [{transform_indices = @transform_0, window_bounds = array<i64: 16, 32>}, {transform_indices = @transform_1, window_bounds = array<i64: 32, 128>}, {transform_indices = @transform_2, window_bounds = array<i64: 64, 32>}, {transform_indices = @transform_3, window_bounds = array<i64: 1, 64>}, {pipeline_mode = #tpu.pipeline_mode<synchronous>, transform_indices = @transform_4, window_bounds = array<i64: 1, 32>}, {transform_indices = @transform_5, window_bounds = array<i64: 16, 32>}]} {
    %c0_i32 = arith.constant 0 : i32
    %0 = arith.cmpi eq, %arg1, %c0_i32 : i32
    %1 = arith.extui %0 : i1 to i32
    %c0_i32_0 = arith.constant 0 : i32
    %2 = arith.cmpi ne, %1, %c0_i32_0 : i32
    scf.if %2 {
      %cst_19 = arith.constant 0.000000e+00 : f32
      %33 = vector.broadcast %cst_19 : f32 to vector<16x32xf32>
      %c0_20 = arith.constant 0 : index
      %c0_21 = arith.constant 0 : index
      %34 = vector.load %arg8[%c0_20, %c0_21] : memref<16x32xf32, #tpu.memory_space<vmem>>, vector<16x32xf32>
      tpu.vector_store %arg8[%c0_20, %c0_21], %33 {strides = array<i32>} : memref<16x32xf32, #tpu.memory_space<vmem>>, vector<16x32xf32>,
    } else {
    }
    %c0 = arith.constant 0 : index
    %c0_1 = arith.constant 0 : index
    %3 = vector.load %arg2[%c0, %c0_1] : memref<16x32xf32, #tpu.memory_space<vmem>>, vector<16x32xf32>
    %c0_2 = arith.constant 0 : index
    %c0_3 = arith.constant 0 : index
    %4 = vector.load %arg3[%c0_2, %c0_3] : memref<32x128xf32, #tpu.memory_space<vmem>>, vector<32x128xf32>
    %cst = arith.constant dense<0.000000e+00> : vector<16x128xf32>
    %5 = tpu.matmul %3, %4, %cst {dimension_numbers = #tpu.dot_dimension_numbers<[1], [0], [0], [1], [0, 0, 1, 1], [], []>} : vector<16x32xf32>, vector<32x128xf32>, vector<16x128xf32> -> vector<16x128xf32>
    %6 = vector.extract_strided_slice %5 {offsets = [0, 0], sizes = [16, 64], strides = [1, 1]} : vector<16x128xf32> to vector<16x64xf32>
    %cst_4 = arith.constant 5.000000e-01 : f32
    %7 = vector.broadcast %cst_4 : f32 to vector<16x64xf32>
    %8 = arith.mulf %7, %6 : vector<16x64xf32>
    %cst_5 = arith.constant 4.471500e-02 : f32
    %9 = vector.broadcast %cst_5 : f32 to vector<16x64xf32>
    %10 = arith.mulf %9, %6 : vector<16x64xf32>
    %11 = arith.mulf %10, %6 : vector<16x64xf32>
    %12 = arith.mulf %11, %6 : vector<16x64xf32>
    %13 = arith.addf %6, %12 : vector<16x64xf32>
    %cst_6 = arith.constant 0.797884583 : f32
    %14 = vector.broadcast %cst_6 : f32 to vector<16x64xf32>
    %15 = arith.mulf %14, %13 : vector<16x64xf32>
    %16 = math.tanh %15 : vector<16x64xf32>
    %cst_7 = arith.constant 1.000000e+00 : f32
    %17 = vector.broadcast %cst_7 : f32 to vector<16x64xf32>
    %18 = arith.addf %17, %16 : vector<16x64xf32>
    %19 = arith.mulf %8, %18 : vector<16x64xf32>
    %20 = vector.extract_strided_slice %5 {offsets = [0, 64], sizes = [16, 64], strides = [1, 1]} : vector<16x128xf32> to vector<16x64xf32>
    %21 = arith.mulf %19, %20 : vector<16x64xf32>
    %c0_8 = arith.constant 0 : index
    %c0_9 = arith.constant 0 : index
    %22 = vector.load %arg5[%c0_8, %c0_9] : memref<1x64xf32, #tpu.memory_space<vmem>>, vector<1x64xf32>
    %23 = vector.broadcast %22 : vector<1x64xf32> to vector<16x64xf32>
    %24 = arith.mulf %21, %23 : vector<16x64xf32>
    %c0_10 = arith.constant 0 : index
    %c0_11 = arith.constant 0 : index
    %25 = vector.load %arg8[%c0_10, %c0_11] : memref<16x32xf32, #tpu.memory_space<vmem>>, vector<16x32xf32>
    %c0_12 = arith.constant 0 : index
    %c0_13 = arith.constant 0 : index
    %26 = vector.load %arg4[%c0_12, %c0_13] : memref<64x32xf32, #tpu.memory_space<vmem>>, vector<64x32xf32>
    %cst_14 = arith.constant dense<0.000000e+00> : vector<16x32xf32>
    %27 = tpu.matmul %24, %26, %cst_14 {dimension_numbers = #tpu.dot_dimension_numbers<[1], [0], [0], [1], [0, 0, 1, 1], [], []>} : vector<16x64xf32>, vector<64x32xf32>, vector<16x32xf32> -> vector<16x32xf32>
    %28 = arith.addf %25, %27 : vector<16x32xf32>
    %c0_15 = arith.constant 0 : index
    %c0_16 = arith.constant 0 : index
    %29 = vector.load %arg8[%c0_15, %c0_16] : memref<16x32xf32, #tpu.memory_space<vmem>>, vector<16x32xf32>
    tpu.vector_store %arg8[%c0_15, %c0_16], %28 {strides = array<i32>} : memref<16x32xf32, #tpu.memory_space<vmem>>, vector<16x32xf32>,
    %c0_i32_17 = arith.constant 0 : i32
    %30 = arith.cmpi eq, %arg1, %c0_i32_17 : i32
    %31 = arith.extui %30 : i1 to i32
    %c0_i32_18 = arith.constant 0 : i32
    %32 = arith.cmpi ne, %31, %c0_i32_18 : i32
    scf.if %32 {
      %c0_19 = arith.constant 0 : index
      %c0_20 = arith.constant 0 : index
      %33 = vector.load %arg8[%c0_19, %c0_20] : memref<16x32xf32, #tpu.memory_space<vmem>>, vector<16x32xf32>
      %c0_21 = arith.constant 0 : index
      %c0_22 = arith.constant 0 : index
      %34 = vector.load %arg6[%c0_21, %c0_22] : memref<1x32xf32, #tpu.memory_space<vmem>>, vector<1x32xf32>
      %35 = vector.broadcast %34 : vector<1x32xf32> to vector<16x32xf32>
      %36 = arith.mulf %33, %35 : vector<16x32xf32>
      %c0_23 = arith.constant 0 : index
      %c0_24 = arith.constant 0 : index
      %37 = vector.load %arg7[%c0_23, %c0_24] : memref<16x32xf32, #tpu.memory_space<vmem>>, vector<16x32xf32>
      tpu.vector_store %arg7[%c0_23, %c0_24], %36 {strides = array<i32>} : memref<16x32xf32, #tpu.memory_space<vmem>>, vector<16x32xf32>,
    } else {
    }
    return
  }
  func.func @transform_0(%arg0: i32, %arg1: i32) -> (i32, i32) {
    %c0_i32 = arith.constant 0 : i32
    %c0_i32_0 = arith.constant 0 : i32
    return %arg0, %c0_i32 : i32, i32
  }
  func.func @transform_1(%arg0: i32, %arg1: i32) -> (i32, i32) {
    %c0_i32 = arith.constant 0 : i32
    %c0_i32_0 = arith.constant 0 : i32
    return %c0_i32, %arg1 : i32, i32
  }
  func.func @transform_2(%arg0: i32, %arg1: i32) -> (i32, i32) {
    %c0_i32 = arith.constant 0 : i32
    %c0_i32_0 = arith.constant 0 : i32
    return %arg1, %c0_i32 : i32, i32
  }
  func.func @transform_3(%arg0: i32, %arg1: i32) -> (i32, i32) {
    %c0_i32 = arith.constant 0 : i32
    %c0_i32_0 = arith.constant 0 : i32
    return %c0_i32, %arg1 : i32, i32
  }
  func.func @transform_4(%arg0: i32, %arg1: i32) -> (i32, i32) {
    %c0_i32 = arith.constant 0 : i32
    %c0_i32_0 = arith.constant 0 : i32
    %c0_i32_1 = arith.constant 0 : i32
    return %c0_i32, %c0_i32_0 : i32, i32
  }
  func.func @transform_5(%arg0: i32, %arg1: i32) -> (i32, i32) {
    %c0_i32 = arith.constant 0 : i32
    %c0_i32_0 = arith.constant 0 : i32
    return %arg0, %c0_i32 : i32, i32
  }
}

</mosaic_0001>

<llo_original>
// kernel: tpu_custom_call.1
$region0: #{tpu_custom_call.1}
  #allocation0 [shape = 'u32[]', space=smem, size = 0x4, offset = 0x4, fixed_abs, tag = 'smem constant byte address 0x4 - core index']
  #allocation1 [shape = 'u32[144,128]{1,0:T(1,128)}', space=vmem, size = 0x12000, scoped, tag = 'internal scratch']
  #allocation2 [shape = 'f32[16,32]{1,0:T(8,128)}', space=vmem, size = 0x2000, scoped, tag = 'scratch operand']
  %s0 = inlined_call_operand.vmem [shape: f32[16,32], index: 0, kind: input, shape index: {}]
  %s1 = inlined_call_operand.vmem [shape: f32[32,128], index: 1, kind: input, shape index: {}]
  %s2 = inlined_call_operand.vmem [shape: f32[64,32], index: 2, kind: input, shape index: {}]
  %s3 = inlined_call_operand.vmem [shape: f32[1,64], index: 3, kind: input, shape index: {}]
  %s4 = inlined_call_operand.vmem [shape: f32[1,32], index: 4, kind: input, shape index: {}]
  %s5 = inlined_call_operand.hbm [shape: f32[16,32], index: 5, kind: output, shape index: {}]
  %s6 = sld [smem:[#allocation0]]
  $region38: #{tpu_custom_call.1} parent=0
    _
  %s8 = ssub.s32 1, %s6
  %s9 = scalar_select 0, %s8, %s6
  $region1: #{tpu_custom_call.1} parent=0
    #allocation3 [shape = 'u8[8192]{0}', space=vmem, size = 0x2000, scoped, tag = 'output window, operand 0, single buffered']
    #allocation4 [shape = 's32[1]{0}', space=sflag, size = 0x4, scoped, tag = 'scoped memory for tpu_custom_call.1']
    %10 = vsyncpa [#allocation4], 0
    // Predicated region
    $region2: #{tpu_custom_call.1} parent=1 // pred_check
      _
    $region3: #{tpu_custom_call.1} parent=1 // pred_check_branch
      %12 = sbr.rel (0) target = $region5
    $region4: #{tpu_custom_call.1} parent=1 // pred_region
      _
    $region5: #{tpu_custom_call.1} parent=1 // pred_fallthru
      _
    // Predicated region
    $region6: #{tpu_custom_call.1} parent=1 // pred_check
      _
    $region7: #{tpu_custom_call.1} parent=1 // pred_check_branch
      %14 = sbr.rel (0) target = $region9
    $region8: #{tpu_custom_call.1} parent=1 // pred_region
      _
    $region9: #{tpu_custom_call.1} parent=1 // pred_fallthru
      _
    // Predicated region
    $region10: #{tpu_custom_call.1} parent=1 // pred_check
      _
    $region11: #{tpu_custom_call.1} parent=1 // pred_check_branch
      %16 = sbr.rel (0) target = $region13
    $region12: #{tpu_custom_call.1} parent=1 // pred_region
      _
    $region13: #{tpu_custom_call.1} parent=1 // pred_fallthru
      _
    // Predicated region
    $region14: #{tpu_custom_call.1} parent=1 // pred_check
      _
    $region15: #{tpu_custom_call.1} parent=1 // pred_check_branch
      %18 = sbr.rel (0) target = $region17
    $region16: #{tpu_custom_call.1} parent=1 // pred_region
      _
    $region17: #{tpu_custom_call.1} parent=1 // pred_fallthru
      _
    // Predicated region
    $region18: #{tpu_custom_call.1} parent=1 // pred_check
      _
    $region19: #{tpu_custom_call.1} parent=1 // pred_check_branch
      %20 = sbr.rel (0) target = $region21
    $region20: #{tpu_custom_call.1} parent=1 // pred_region
      _
    $region21: #{tpu_custom_call.1} parent=1 // pred_fallthru
      _
    %p21 = scmp.eq.s32.totalorder 0, 0
    // Predicated region
    $region22: #{tpu_custom_call.1} parent=1 // pred_check
      %p22 = pneg %p21
    $region23: #{tpu_custom_call.1} parent=1 // pred_check_branch
      %24 = sbr.rel (%p22) target = $region25
    $region24: #{tpu_custom_call.1} parent=1 // pred_region
      %vm25 = vcmask 261120
      %26 = vst.msk [vmem:[#allocation2] sm:$0xff] %vm25, 0.0
      %27 = vst.msk [vmem:[#allocation2 + $0x8] sm:$0xff] %vm25, 0.0
    $region25: #{tpu_custom_call.1} parent=1 // pred_fallthru
      _
    %v28 = vld [vmem:[%s0] sm:$0xff]
    %v29 = vld [vmem:[%s0 + $0x8] sm:$0xff]
    %v30 = vld [vmem:[%s1] sm:$0xff]
    %v31 = vld [vmem:[%s1 + $0x8] sm:$0xff]
    %v32 = vld [vmem:[%s1 + $0x10] sm:$0xff]
    %v33 = vld [vmem:[%s1 + $0x18] sm:$0xff]
    %vm34 = vcmask 261120
    %v36 = vsel %vm34, %v28, 0
    %v39 = vsel %vm34, %v29, 0
    %41 = vmatprep.subr.mxu0 0.0
    %42 = vmatpush1.msra.mxu0 %v30
    %43 = vmatprep.subr.mxu0 0.0
    %44 = vmatpush1.msra.mxu0 %v31
    %45 = vmatprep.subr.mxu0 0.0
    %46 = vmatpush1.msra.mxu0 %v32
    %47 = vmatprep.subr.mxu0 0.0
    %48 = vmatpush1.msra.mxu0 %v33
    %49 = vmatprep.subr.mxu0 0.0
    %50 = vmatpush1.msra.mxu0 0.0
    %51 = vmatprep.subr.mxu0 0.0
    %52 = vmatpush1.msra.mxu0 0.0
    %53 = vmatprep.subr.mxu0 0.0
    %54 = vmatpush1.msra.mxu0 0.0
    %55 = vmatprep.subr.mxu0 0.0
    %56 = vmatpush1.msra.mxu0 0.0
    %57 = vmatprep.subr.mxu0 0.0
    %58 = vmatpush1.msra.mxu0 0.0
    %59 = vmatprep.subr.mxu0 0.0
    %60 = vmatpush1.msra.mxu0 0.0
    %61 = vmatprep.subr.mxu0 0.0
    %62 = vmatpush1.msra.mxu0 0.0
    %63 = vmatprep.subr.mxu0 0.0
    %64 = vmatpush1.msra.mxu0 0.0
    %65 = vmatprep.subr.mxu0 0.0
    %66 = vmatpush1.msra.mxu0 0.0
    %67 = vmatprep.subr.mxu0 0.0
    %68 = vmatpush1.msra.mxu0 0.0
    %69 = vmatprep.subr.mxu0 0.0
    %70 = vmatpush1.msra.mxu0 0.0
    %71 = vmatprep.subr.mxu0 0.0
    %72 = vmatpush1.msra.mxu0 0.0
    %73 = vmatprep.subr.mxu0 0.0
    %74 = vmatpush1.msra.mxu0 0.0
    %75 = vmatprep.subr.mxu0 0.0
    %76 = vmatpush1.msra.mxu0 0.0
    %77 = vmatprep.subr.mxu0 0.0
    %78 = vmatpush1.msra.mxu0 0.0
    %79 = vmatprep.subr.mxu0 0.0
    %80 = vmatpush1.msra.mxu0 0.0
    %81 = vmatprep.subr.mxu0 0.0
    %82 = vmatpush1.msra.mxu0 0.0
    %83 = vmatprep.subr.mxu0 0.0
    %84 = vmatpush1.msra.mxu0 0.0
    %85 = vmatprep.subr.mxu0 0.0
    %86 = vmatpush1.msra.mxu0 0.0
    %87 = vmatprep.subr.mxu0 0.0
    %88 = vmatpush1.msra.mxu0 0.0
    %89 = vmatprep.subr.mxu0 0.0
    %90 = vmatpush1.msra.mxu0 0.0
    %91 = vmatprep.subr.mxu0 0.0
    %92 = vmatpush1.msra.mxu0 0.0
    %93 = vmatprep.subr.mxu0 0.0
    %94 = vmatpush1.msra.mxu0 0.0
    %95 = vmatprep.subr.mxu0 0.0
    %96 = vmatpush1.msra.mxu0 0.0
    %97 = vmatprep.subr.mxu0 0.0
    %98 = vmatpush1.msra.mxu0 0.0
    %99 = vmatprep.subr.mxu0 0.0
    %100 = vmatpush1.msra.mxu0 0.0
    %101 = vmatprep.subr.mxu0 0.0
    %102 = vmatpush1.msra.mxu0 0.0
    %103 = vmatprep.subr.mxu0 0.0
    %104 = vmatpush1.msra.mxu0 0.0
    %105 = vmatprep.mubr.f32.mxu0 0.0
    %106 = vmatmul.mubr.f32.gmra.mrb[0].mxu0 %v36
    %v107 = vpop.f32.mrb[0].mxu0
    %v108 = vadd.f32 0.0, %v107
    %v109 = vpop.f32.mrb[0].mxu0
    %110 = vmatprep.mubr.f32.mxu0 0.0
    %111 = vmatmul.mubr.f32.gmra.mrb[0].mxu0 %v39
    %v112 = vpop.f32.mrb[0].mxu0
    %v113 = vadd.f32 0.0, %v112
    %v114 = vpop.f32.mrb[0].mxu0
    %115 = vdwg.mxu0
    %v116 = vmul.f32 %v108, 0.5
    %v117 = vmul.f32 %v113, 0.5
    %v118 = vmul.f32 %v108, 0.044715
    %v119 = vmul.f32 %v113, 0.044715
    %v120 = vmul.f32 %v118, %v108
    %v121 = vmul.f32 %v119, %v113
    %v122 = vmul.f32 %v120, %v108
    %v123 = vmul.f32 %v121, %v113
    %v124 = vadd.f32 %v108, %v122
    %v125 = vadd.f32 %v113, %v123
    %v126 = vmul.f32 %v124, 0.7978846
    %v127 = vmul.f32 %v125, 0.7978846
    %v128 = vtanh.pop %v126
    %v129 = vtanh.pop %v127
    %v130 = vadd.f32 %v128, 1.0
    %v131 = vadd.f32 %v129, 1.0
    %v132 = vmul.f32 %v116, %v130
    %v133 = vmul.f32 %v117, %v131
    %136 = vrot.lane.b32.xlu0 %v108, 64
    %v137 = vpop.permute.xlu0 %136
    %138 = vrot.lane.b32.xlu0 %v113, 64
    %v139 = vpop.permute.xlu0 %138
    %v142 = vmul.f32 %v132, %v137
    %v143 = vmul.f32 %v133, %v139
    %v144 = vld [vmem:[%s3] sm:$0x1]
    %v146 = vlaneseq
    %v147 = vshrl.u32 %v146, 7
    %v148 = vsub.s32 0, %v147
    %v149 = vrot.slane %v144, %v148
    %v151 = vmul.f32 %v142, %v149
    %v152 = vmul.f32 %v143, %v149
    %v153 = vld [vmem:[#allocation2] sm:$0xff]
    %v154 = vld [vmem:[#allocation2 + $0x8] sm:$0xff]
    %v155 = vld [vmem:[%s2] sm:$0xff]
    %v156 = vld [vmem:[%s2 + $0x8] sm:$0xff]
    %v157 = vld [vmem:[%s2 + $0x10] sm:$0xff]
    %v158 = vld [vmem:[%s2 + $0x18] sm:$0xff]
    %v159 = vld [vmem:[%s2 + $0x20] sm:$0xff]
    %v160 = vld [vmem:[%s2 + $0x28] sm:$0xff]
    %v161 = vld [vmem:[%s2 + $0x30] sm:$0xff]
    %v162 = vld [vmem:[%s2 + $0x38] sm:$0xff]
    %vm163 = vcmask 523264
    %v165 = vsel %vm163, %v151, 0
    %v168 = vsel %vm163, %v152, 0
    %170 = vmatprep.subr.mxu0 0.0
    %171 = vmatpush1.msra.mxu0 %v155
    %172 = vmatprep.subr.mxu0 0.0
    %173 = vmatpush1.msra.mxu0 %v156
    %174 = vmatprep.subr.mxu0 0.0
    %175 = vmatpush1.msra.mxu0 %v157
    %176 = vmatprep.subr.mxu0 0.0
    %177 = vmatpush1.msra.mxu0 %v158
    %178 = vmatprep.subr.mxu0 0.0
    %179 = vmatpush1.msra.mxu0 %v159
    %180 = vmatprep.subr.mxu0 0.0
    %181 = vmatpush1.msra.mxu0 %v160
    %182 = vmatprep.subr.mxu0 0.0
    %183 = vmatpush1.msra.mxu0 %v161
    %184 = vmatprep.subr.mxu0 0.0
    %185 = vmatpush1.msra.mxu0 %v162
    %186 = vmatprep.subr.mxu0 0.0
    %187 = vmatpush1.msra.mxu0 0.0
    %188 = vmatprep.subr.mxu0 0.0
    %189 = vmatpush1.msra.mxu0 0.0
    %190 = vmatprep.subr.mxu0 0.0
    %191 = vmatpush1.msra.mxu0 0.0
    %192 = vmatprep.subr.mxu0 0.0
    %193 = vmatpush1.msra.mxu0 0.0
    %194 = vmatprep.subr.mxu0 0.0
    %195 = vmatpush1.msra.mxu0 0.0
    %196 = vmatprep.subr.mxu0 0.0
    %197 = vmatpush1.msra.mxu0 0.0
    %198 = vmatprep.subr.mxu0 0.0
    %199 = vmatpush1.msra.mxu0 0.0
    %200 = vmatprep.subr.mxu0 0.0
    %201 = vmatpush1.msra.mxu0 0.0
    %202 = vmatprep.subr.mxu0 0.0
    %203 = vmatpush1.msra.mxu0 0.0
    %204 = vmatprep.subr.mxu0 0.0
    %205 = vmatpush1.msra.mxu0 0.0
    %206 = vmatprep.subr.mxu0 0.0
    %207 = vmatpush1.msra.mxu0 0.0
    %208 = vmatprep.subr.mxu0 0.0
    %209 = vmatpush1.msra.mxu0 0.0
    %210 = vmatprep.subr.mxu0 0.0
    %211 = vmatpush1.msra.mxu0 0.0
    %212 = vmatprep.subr.mxu0 0.0
    %213 = vmatpush1.msra.mxu0 0.0
    %214 = vmatprep.subr.mxu0 0.0
    %215 = vmatpush1.msra.mxu0 0.0
    %216 = vmatprep.subr.mxu0 0.0
    %217 = vmatpush1.msra.mxu0 0.0
    %218 = vmatprep.subr.mxu0 0.0
    %219 = vmatpush1.msra.mxu0 0.0
    %220 = vmatprep.subr.mxu0 0.0
    %221 = vmatpush1.msra.mxu0 0.0
    %222 = vmatprep.subr.mxu0 0.0
    %223 = vmatpush1.msra.mxu0 0.0
    %224 = vmatprep.subr.mxu0 0.0
    %225 = vmatpush1.msra.mxu0 0.0
    %226 = vmatprep.subr.mxu0 0.0
    %227 = vmatpush1.msra.mxu0 0.0
    %228 = vmatprep.subr.mxu0 0.0
    %229 = vmatpush1.msra.mxu0 0.0
    %230 = vmatprep.subr.mxu0 0.0
    %231 = vmatpush1.msra.mxu0 0.0
    %232 = vmatprep.subr.mxu0 0.0
    %233 = vmatpush1.msra.mxu0 0.0
    %234 = vmatprep.mubr.f32.mxu0 0.0
    %235 = vmatmul.mubr.f32.gmra.mrb[0].mxu0 %v165
    %v236 = vpop.f32.mrb[0].mxu0
    %v237 = vadd.f32 0.0, %v236
    %v238 = vpop.f32.mrb[0].mxu0
    %239 = vmatprep.mubr.f32.mxu0 0.0
    %240 = vmatmul.mubr.f32.gmra.mrb[0].mxu0 %v168
    %v241 = vpop.f32.mrb[0].mxu0
    %v242 = vadd.f32 0.0, %v241
    %v243 = vpop.f32.mrb[0].mxu0
    %244 = vdwg.mxu0
    %v245 = vadd.f32 %v153, %v237
    %v246 = vadd.f32 %v154, %v242
    %247 = vst.msk [vmem:[#allocation2] sm:$0xff] %vm34, %v245
    %248 = vst.msk [vmem:[#allocation2 + $0x8] sm:$0xff] %vm34, %v246
    // Predicated region
    $region26: #{tpu_custom_call.1} parent=1 // pred_check
      %p249 = pneg %p21
    $region27: #{tpu_custom_call.1} parent=1 // pred_check_branch
      %251 = sbr.rel (%p249) target = $region29
    $region28: #{tpu_custom_call.1} parent=1 // pred_region
      %v252 = vld [vmem:[#allocation2] sm:$0xff]
      %v253 = vld [vmem:[#allocation2 + $0x8] sm:$0xff]
      %v254 = vld [vmem:[%s4] sm:$0x1]
      %v256 = vlaneseq
      %v257 = vshrl.u32 %v256, 7
      %v258 = vsub.s32 0, %v257
      %v259 = vrot.slane %v254, %v258
      %v261 = vmul.f32 %v252, %v259
      %v262 = vmul.f32 %v253, %v259
      %263 = vst.msk [vmem:[#allocation3] sm:$0xff] %vm34, %v261
      %264 = vst.msk [vmem:[#allocation3 + $0x8] sm:$0xff] %vm34, %v262
    $region29: #{tpu_custom_call.1} parent=1 // pred_fallthru
      _
    // Predicated region
    $region30: #{tpu_custom_call.1} parent=1 // pred_check
      _
    $region31: #{tpu_custom_call.1} parent=1 // pred_check_branch
      %266 = sbr.rel (0) target = $region33
    $region32: #{tpu_custom_call.1} parent=1 // pred_region
      %s268 = ssub.s32 256, 256
      %269 = vsyncadd [#allocation4], %s268
      %s270 = sshll.u32 [#allocation3], 4
      %s271 = int_to_ptr.vmem [resolvable:$true] %s270
      %276 = dma.vmem_to_hbm [thread:$0]  %s271, 256, %s5, [#allocation4], 128, 128, 8
    $region33: #{tpu_custom_call.1} parent=1 // pred_fallthru
      _
    // Predicated region
    $region34: #{tpu_custom_call.1} parent=1 // pred_check
      _
    $region35: #{tpu_custom_call.1} parent=1 // pred_check_branch
      %278 = sbr.rel (0) target = $region37
    $region36: #{tpu_custom_call.1} parent=1 // pred_region
      %279 = dma.done [#allocation4], 256
    $region37: #{tpu_custom_call.1} parent=1 // pred_fallthru
      _
    %280 = vsyncpa [#allocation4], 1

</llo_original>
